<compile_context>
chip_gen: v6e
topology: v6e:2x2x1
jax: 0.10.0
libtpu: 0.0.40
codegen_flags: <defaults>
</compile_context>

<pallas_src>
import functools
import math

import jax
import jax.numpy as jnp
from jax.experimental import pallas as pl
from jax.experimental.pallas import tpu as pltpu


def round_up(x, m):
    return (x + m - 1) // m * m


NEG_BIG = -1.0e30  # baked into padded class lanes of the bias -> exp underflows to 0


# -----------------------------------------------------------------------------
# Fused Pallas kernel.  Grid: (M_blocks, K_blocks); N (classes) is one lane tile.
# -----------------------------------------------------------------------------
def fused_linear_softmax_kernel(x_ref, w_ref, b_ref, logits_ref, probs_ref, *,
                                tk, w_resident):
    k = pl.program_id(1)

    @pl.when(k == 0)
    def _():
        logits_ref[...] = jnp.zeros_like(logits_ref)

    # Pick this K-step's weight slab.  Resident W is a single (pad_k, pad_n) block
    # that Pallas fetches once (index map is constant); streamed W is one (tk, pad_n)
    # block per K step.
    if w_resident and w_ref.shape[0] != tk:
        start = pl.multiple_of(k * tk, tk)
        w = w_ref[pl.ds(start, tk), :]
    else:
        w = w_ref[...]

    # x streams from HBM untouched; cast the VMEM tile to bf16 for the single-pass
    # MXU path, accumulate in f32 directly into the resident output block.
    x = x_ref[...].astype(jnp.bfloat16)
    logits_ref[...] += jnp.dot(x, w, preferred_element_type=jnp.float32)

    @pl.when(k == pl.num_programs(1) - 1)
    def _():
        # Bias already contains the folded affine shift; padded lanes hold NEG_BIG,
        # so no iota/where masking is needed for the softmax.
        logits = logits_ref[...] + b_ref[...]
        logits_ref[...] = logits
        m = jnp.max(logits, axis=-1, keepdims=True)
        e = jnp.exp(logits - m)
        probs_ref[...] = e / jnp.sum(e, axis=-1, keepdims=True)


# -----------------------------------------------------------------------------
# Parameters (deterministic synthetic init matching the PyTorch module's shapes)
# -----------------------------------------------------------------------------
def init_params(key, num_classes, input_shape):
    """linear_model_DN_IN(num_classes, input_shape, bn_stats=False)."""
    k_w, k_b = jax.random.split(key)
    bound = 1.0 / math.sqrt(input_shape)
    w = jax.random.uniform(k_w, (num_classes, input_shape), jnp.float32,
                           minval=-bound, maxval=bound)   # torch Linear layout (out, in)
    b = jax.random.uniform(k_b, (num_classes,), jnp.float32,
                           minval=-bound, maxval=bound)
    return {
        "backbone_w": w,
        "backbone_b": b,
        "norm_gamma": jnp.ones((1,), jnp.float32),            # FeatureNorm.gamma
        "norm_beta": jnp.zeros((1, input_shape), jnp.float32),  # FeatureNorm.beta
        "bn_mean": jnp.zeros((input_shape,), jnp.float32),      # bn_stats=False defaults
        "bn_var": jnp.ones((input_shape,), jnp.float32),
    }


def prepare(params, *, tk_cap=2048, w_resident_bytes=8 * 1024 * 1024):
    """Fold normalizations into W/b and pad everything to tile boundaries ONCE."""
    num_classes, input_shape = params["backbone_w"].shape
    pad_n = round_up(num_classes, 128)

    # forward:  x' = x * sum(gamma) + beta
    #           x' = (x' - mean) / sqrt(var + 1e-5) ; x' *= (var != 0)
    # => x' = x * scale + shift, folded into the Linear:
    #    logits = x @ (scale[:,None] * W.T) + (shift @ W.T + b)
    gamma_sum = jnp.sum(params["norm_gamma"])
    inv = jnp.where(params["bn_var"] != 0.0,
                    1.0 / jnp.sqrt(params["bn_var"] + 1e-5), 0.0)
    scale = gamma_sum * inv                                     # (K,)
    shift = (params["norm_beta"][0] - params["bn_mean"]) * inv  # (K,)

    w_t = params["backbone_w"].T.astype(jnp.float32)            # (K, N)
    w_folded = scale[:, None] * w_t                             # (K, N), f32
    b_folded = params["backbone_b"] + shift @ w_t               # (N,),   f32

    # K tiling: one big block if it fits the cap, else tk_cap-sized blocks.
    pad_k0 = round_up(input_shape, 128)
    if pad_k0 <= tk_cap:
        tk, pad_k = pad_k0, pad_k0
    else:
        tk, pad_k = tk_cap, round_up(input_shape, tk_cap)

    w_resident = pad_k * pad_n * 2 <= w_resident_bytes          # bf16 bytes

    wp = (jnp.zeros((pad_k, pad_n), jnp.float32)
          .at[:input_shape, :num_classes].set(w_folded)
          .astype(jnp.bfloat16))
    bp = (jnp.full((1, pad_n), NEG_BIG, jnp.float32)
          .at[0, :num_classes].set(b_folded))

    return {"w": wp, "b": bp, "num_classes": num_classes,
            "input_shape": input_shape, "tk": tk, "w_resident": w_resident}


def make_forward(prepared):
    pad_k, pad_n = prepared["w"].shape
    n_valid = prepared["num_classes"]
    k_valid = prepared["input_shape"]
    tk = prepared["tk"]
    w_resident = prepared["w_resident"]
    wp, bp = prepared["w"], prepared["b"]

    kernel = functools.partial(fused_linear_softmax_kernel,
                               tk=tk, w_resident=w_resident)

    if w_resident:
        w_spec = pl.BlockSpec((pad_k, pad_n), lambda i, k: (0, 0))  # fetched once
    else:
        w_spec = pl.BlockSpec((tk, pad_n), lambda i, k: (k, 0))     # streamed per K

    @jax.jit
    def forward(x):
        m = x.shape[0]
        # M tile: distribute rows evenly over ceil(m/512) blocks; if that leaves a
        # single block and it can be split, split it so v7x's two TensorCores both
        # get work.  (Recompiles per new batch size: perf note, not correctness.)
        n_blk = -(-m // 512)
        tm = round_up(-(-m // n_blk), 8)
        if round_up(m, tm) // tm < 2 and tm >= 16:
            tm = round_up(-(-m // 2), 8)
        pad_m = round_up(m, tm)

        xb = x
        if pad_m != m or pad_k != k_valid:
            xb = jnp.pad(xb, ((0, pad_m - m), (0, pad_k - k_valid)))

        grid = (pad_m // tm, pad_k // tk)
        logits_p, probs_p = pl.pallas_call(
            kernel,
            out_shape=(jax.ShapeDtypeStruct((pad_m, pad_n), jnp.float32),
                       jax.ShapeDtypeStruct((pad_m, pad_n), jnp.float32)),
            grid_spec=pltpu.PrefetchScalarGridSpec(
                num_scalar_prefetch=0,
                grid=grid,
                in_specs=[
                    pl.BlockSpec((tm, tk), lambda i, k: (i, k)),     # x
                    w_spec,                                          # W (folded, bf16)
                    pl.BlockSpec((1, pad_n), lambda i, k: (0, 0)),   # bias (folded)
                ],
                out_specs=[
                    pl.BlockSpec((tm, pad_n), lambda i, k: (i, 0)),  # logits (acc)
                    pl.BlockSpec((tm, pad_n), lambda i, k: (i, 0)),  # probs
                ],
            ),
            compiler_params=pltpu.CompilerParams(
                dimension_semantics=("parallel", "arbitrary"),
                vmem_limit_bytes=32 * 1024 * 1024),
        )(xb, wp, bp)
        return logits_p[:m, :n_valid], probs_p[:m, :n_valid]

    return forward


if __name__ == "__main__":
    num_classes = 10
    input_shape = 32
    batch = 2

    key = jax.random.PRNGKey(0)
    k_param, k_x = jax.random.split(key)
    params = init_params(k_param, num_classes, input_shape)
    prepared = prepare(params)
    forward = make_forward(prepared)

    x = jax.random.normal(k_x, (batch, input_shape), jnp.float32)
    logits, probs = forward(x)
    jax.block_until_ready((logits, probs))

    # Pure-JAX f32 reference following the PyTorch forward op-for-op.
    gamma_sum = jnp.sum(params["norm_gamma"])
    xr = x * gamma_sum + params["norm_beta"]
    xr = (xr - params["bn_mean"][None, :]) / jnp.sqrt(params["bn_var"][None, :] + 1e-5)
    xr = xr * (params["bn_var"][None, :] != 0.0)
    ref_logits = xr @ params["backbone_w"].T + params["backbone_b"]
    ref_probs = jax.nn.softmax(ref_logits, axis=1)

    assert logits.shape == (batch, num_classes)
    assert probs.shape == (batch, num_classes)
    assert bool(jnp.all(jnp.isfinite(logits)))
    # bf16 matmul path -> tolerances loosened accordingly (per review).
    assert bool(jnp.allclose(logits, ref_logits, atol=3e-2, rtol=3e-2))
    assert bool(jnp.allclose(probs, ref_probs, atol=5e-3, rtol=5e-3))
    assert bool(jnp.allclose(jnp.sum(probs, axis=-1), 1.0, atol=1e-5))
    print("KERNEL_OK")
</pallas_src>

<mosaic_0001>
module attributes {stable_mosaic.version = 11 : i64} {
  func.func @fused_linear_softmax_kernel(%arg0: i32, %arg1: i32, %arg2: memref<8x128xf32, #tpu.memory_space<vmem>>, %arg3: memref<128x128xbf16, #tpu.memory_space<vmem>>, %arg4: memref<1x128xf32, #tpu.memory_space<vmem>>, %arg5: memref<8x128xf32, #tpu.memory_space<vmem>>, %arg6: memref<8x128xf32, #tpu.memory_space<vmem>>) attributes {dimension_semantics = [#tpu.dimension_semantics<parallel>, #tpu.dimension_semantics<arbitrary>], iteration_bounds = array<i64: 1, 1>, scalar_prefetch = 0 : i64, scratch_operands = 0 : i64, tpu.core_type = #tpu.core_type<tc>, window_params = [{transform_indices = @transform_0, window_bounds = array<i64: 8, 128>}, {pipeline_mode = #tpu.pipeline_mode<synchronous>, transform_indices = @transform_1, window_bounds = array<i64: 128, 128>}, {pipeline_mode = #tpu.pipeline_mode<synchronous>, transform_indices = @transform_2, window_bounds = array<i64: 1, 128>}, {transform_indices = @transform_3, window_bounds = array<i64: 8, 128>}, {transform_indices = @transform_4, window_bounds = array<i64: 8, 128>}]} {
    %c0_i32 = arith.constant 0 : i32
    %0 = arith.cmpi eq, %arg1, %c0_i32 : i32
    %1 = arith.extui %0 : i1 to i32
    %c0_i32_0 = arith.constant 0 : i32
    %2 = arith.cmpi ne, %1, %c0_i32_0 : i32
    scf.if %2 {
      %cst_10 = arith.constant 0.000000e+00 : f32
      %13 = vector.broadcast %cst_10 : f32 to vector<8x128xf32>
      %c0_11 = arith.constant 0 : index
      %c0_12 = arith.constant 0 : index
      %14 = vector.load %arg5[%c0_11, %c0_12] : memref<8x128xf32, #tpu.memory_space<vmem>>, vector<8x128xf32>
      tpu.vector_store %arg5[%c0_11, %c0_12], %13 {strides = array<i32>} : memref<8x128xf32, #tpu.memory_space<vmem>>, vector<8x128xf32>,
    } else {
    }
    %c0 = arith.constant 0 : index
    %c0_1 = arith.constant 0 : index
    %3 = vector.load %arg3[%c0, %c0_1] : memref<128x128xbf16, #tpu.memory_space<vmem>>, vector<128x128xbf16>
    %c0_2 = arith.constant 0 : index
    %c0_3 = arith.constant 0 : index
    %4 = vector.load %arg2[%c0_2, %c0_3] : memref<8x128xf32, #tpu.memory_space<vmem>>, vector<8x128xf32>
    %5 = arith.truncf %4 : vector<8x128xf32> to vector<8x128xbf16>
    %c0_4 = arith.constant 0 : index
    %c0_5 = arith.constant 0 : index
    %6 = vector.load %arg5[%c0_4, %c0_5] : memref<8x128xf32, #tpu.memory_space<vmem>>, vector<8x128xf32>
    %cst = arith.constant dense<0.000000e+00> : vector<8x128xf32>
    %7 = tpu.matmul %5, %3, %cst {dimension_numbers = #tpu.dot_dimension_numbers<[1], [0], [0], [1], [0, 0, 1, 1], [], []>} : vector<8x128xbf16>, vector<128x128xbf16>, vector<8x128xf32> -> vector<8x128xf32>
    %8 = arith.addf %6, %7 : vector<8x128xf32>
    %c0_6 = arith.constant 0 : index
    %c0_7 = arith.constant 0 : index
    %9 = vector.load %arg5[%c0_6, %c0_7] : memref<8x128xf32, #tpu.memory_space<vmem>>, vector<8x128xf32>
    tpu.vector_store %arg5[%c0_6, %c0_7], %8 {strides = array<i32>} : memref<8x128xf32, #tpu.memory_space<vmem>>, vector<8x128xf32>,
    %c0_i32_8 = arith.constant 0 : i32
    %10 = arith.cmpi eq, %arg1, %c0_i32_8 : i32
    %11 = arith.extui %10 : i1 to i32
    %c0_i32_9 = arith.constant 0 : i32
    %12 = arith.cmpi ne, %11, %c0_i32_9 : i32
    scf.if %12 {
      %c0_10 = arith.constant 0 : index
      %c0_11 = arith.constant 0 : index
      %13 = vector.load %arg5[%c0_10, %c0_11] : memref<8x128xf32, #tpu.memory_space<vmem>>, vector<8x128xf32>
      %c0_12 = arith.constant 0 : index
      %c0_13 = arith.constant 0 : index
      %14 = vector.load %arg4[%c0_12, %c0_13] : memref<1x128xf32, #tpu.memory_space<vmem>>, vector<1x128xf32>
      %15 = vector.broadcast %14 : vector<1x128xf32> to vector<8x128xf32>
      %16 = arith.addf %13, %15 : vector<8x128xf32>
      %c0_14 = arith.constant 0 : index
      %c0_15 = arith.constant 0 : index
      %17 = vector.load %arg5[%c0_14, %c0_15] : memref<8x128xf32, #tpu.memory_space<vmem>>, vector<8x128xf32>
      tpu.vector_store %arg5[%c0_14, %c0_15], %16 {strides = array<i32>} : memref<8x128xf32, #tpu.memory_space<vmem>>, vector<8x128xf32>,
      %cst_16 = arith.constant dense<0xFF800000> : vector<8xf32>
      %18 = vector.multi_reduction <maximumf>, %16, %cst_16 [1] : vector<8x128xf32> to vector<8xf32>
      %19 = vector.shape_cast %18 : vector<8xf32> to vector<8x1xf32>
      %20 = vector.broadcast %19 : vector<8x1xf32> to vector<8x128xf32>
      %21 = arith.subf %16, %20 : vector<8x128xf32>
      %22 = math.exp %21 : vector<8x128xf32>
      %cst_17 = arith.constant dense<0.000000e+00> : vector<8xf32>
      %23 = vector.multi_reduction <add>, %22, %cst_17 [1] : vector<8x128xf32> to vector<8xf32>
      %24 = vector.shape_cast %23 : vector<8xf32> to vector<8x1xf32>
      %25 = vector.broadcast %24 : vector<8x1xf32> to vector<8x128xf32>
      %26 = arith.divf %22, %25 : vector<8x128xf32>
      %c0_18 = arith.constant 0 : index
      %c0_19 = arith.constant 0 : index
      %27 = vector.load %arg6[%c0_18, %c0_19] : memref<8x128xf32, #tpu.memory_space<vmem>>, vector<8x128xf32>
      tpu.vector_store %arg6[%c0_18, %c0_19], %26 {strides = array<i32>} : memref<8x128xf32, #tpu.memory_space<vmem>>, vector<8x128xf32>,
    } else {
    }
    return
  }
  func.func @transform_0(%arg0: i32, %arg1: i32) -> (i32, i32) {
    %c0_i32 = arith.constant 0 : i32
    return %arg0, %arg1 : i32, i32
  }
  func.func @transform_1(%arg0: i32, %arg1: i32) -> (i32, i32) {
    %c0_i32 = arith.constant 0 : i32
    %c0_i32_0 = arith.constant 0 : i32
    %c0_i32_1 = arith.constant 0 : i32
    return %c0_i32, %c0_i32_0 : i32, i32
  }
  func.func @transform_2(%arg0: i32, %arg1: i32) -> (i32, i32) {
    %c0_i32 = arith.constant 0 : i32
    %c0_i32_0 = arith.constant 0 : i32
    %c0_i32_1 = arith.constant 0 : i32
    return %c0_i32, %c0_i32_0 : i32, i32
  }
  func.func @transform_3(%arg0: i32, %arg1: i32) -> (i32, i32) {
    %c0_i32 = arith.constant 0 : i32
    %c0_i32_0 = arith.constant 0 : i32
    return %arg0, %c0_i32 : i32, i32
  }
  func.func @transform_4(%arg0: i32, %arg1: i32) -> (i32, i32) {
    %c0_i32 = arith.constant 0 : i32
    %c0_i32_0 = arith.constant 0 : i32
    return %arg0, %c0_i32 : i32, i32
  }
}

</mosaic_0001>

<llo_original>
// kernel: forward.1
$region0: #{forward.1}
  #allocation0 [shape = 'u32[]', space=smem, size = 0x4, offset = 0x4, fixed_abs, tag = 'smem constant byte address 0x4 - core index']
  #allocation1 [shape = 'u32[144,128]{1,0:T(1,128)}', space=vmem, size = 0x12000, scoped, tag = 'internal scratch']
  %s0 = inlined_call_operand.vmem [shape: f32[8,128], index: 0, kind: input, shape index: {}]
  %s1 = inlined_call_operand.hbm [shape: bf16[128,128], index: 1, kind: input, shape index: {}]
  %s2 = inlined_call_operand.vmem [shape: f32[1,128], index: 2, kind: input, shape index: {}]
  %s3 = inlined_call_operand.vmem [shape: f32[8,128], index: 3, kind: output, shape index: {0}]
  %s4 = inlined_call_operand.vmem [shape: f32[8,128], index: 4, kind: output, shape index: {1}]
  %5 = xla_tuple %s3, %s4
  %s6 = sld [smem:[#allocation0]]
  $region42: #{forward.1} parent=0
    _
  %s8 = ssub.s32 1, %s6
  %s9 = scalar_select 0, %s8, %s6
  $region1: #{forward.1} parent=0
    #allocation2 [shape = 'u8[32768]{0}', space=vmem, size = 0x8000, scoped, tag = 'input window, operand 1, single buffered']
    #allocation3 [shape = 's32[1]{0}', space=sflag, size = 0x4, scoped, tag = 'scoped memory for forward.1']
    %10 = vsyncpa [#allocation3], 0
    // Predicated region
    $region2: #{forward.1} parent=1 // pred_check
      _
    $region3: #{forward.1} parent=1 // pred_check_branch
      %12 = sbr.rel (0) target = $region5
    $region4: #{forward.1} parent=1 // pred_region
      _
    $region5: #{forward.1} parent=1 // pred_fallthru
      _
    // Predicated region
    $region6: #{forward.1} parent=1 // pred_check
      _
    $region7: #{forward.1} parent=1 // pred_check_branch
      %14 = sbr.rel (0) target = $region9
    $region8: #{forward.1} parent=1 // pred_region
      %s16 = ssub.s32 1024, 1024
      %17 = vsyncadd [#allocation3], %s16
      %s18 = sshll.u32 [#allocation2], 4
      %s19 = int_to_ptr.vmem [resolvable:$true] %s18
      %24 = dma.hbm_to_vmem [thread:$0]  %s1, 1024, %s19, [#allocation3], 64, 64, 4
    $region9: #{forward.1} parent=1 // pred_fallthru
      _
    // Predicated region
    $region10: #{forward.1} parent=1 // pred_check
      _
    $region11: #{forward.1} parent=1 // pred_check_branch
      %26 = sbr.rel (0) target = $region13
    $region12: #{forward.1} parent=1 // pred_region
      _
    $region13: #{forward.1} parent=1 // pred_fallthru
      _
    // Predicated region
    $region14: #{forward.1} parent=1 // pred_check
      _
    $region15: #{forward.1} parent=1 // pred_check_branch
      %28 = sbr.rel (0) target = $region17
    $region16: #{forward.1} parent=1 // pred_region
      %29 = dma.done [#allocation3], 1024
    $region17: #{forward.1} parent=1 // pred_fallthru
      _
    %p31 = scmp.eq.s32.totalorder 0, 0
    // Predicated region
    $region18: #{forward.1} parent=1 // pred_check
      %p32 = pneg %p31
    $region19: #{forward.1} parent=1 // pred_check_branch
      %34 = sbr.rel (%p32) target = $region21
    $region20: #{forward.1} parent=1 // pred_region
      %35 = vst [vmem:[%s3] sm:$0xff] 0.0
    $region21: #{forward.1} parent=1 // pred_fallthru
      _
    %v36 = vld [vmem:[#allocation2] sm:$0xf]
    %v37 = vld [vmem:[#allocation2 + $0x4] sm:$0xf]
    %v38 = vld [vmem:[#allocation2 + $0x8] sm:$0xf]
    %v39 = vld [vmem:[#allocation2 + $0xc] sm:$0xf]
    %v40 = vld [vmem:[#allocation2 + $0x10] sm:$0xf]
    %v41 = vld [vmem:[#allocation2 + $0x14] sm:$0xf]
    %v42 = vld [vmem:[#allocation2 + $0x18] sm:$0xf]
    %v43 = vld [vmem:[#allocation2 + $0x1c] sm:$0xf]
    %v44 = vld [vmem:[#allocation2 + $0x20] sm:$0xf]
    %v45 = vld [vmem:[#allocation2 + $0x24] sm:$0xf]
    %v46 = vld [vmem:[#allocation2 + $0x28] sm:$0xf]
    %v47 = vld [vmem:[#allocation2 + $0x2c] sm:$0xf]
    %v48 = vld [vmem:[#allocation2 + $0x30] sm:$0xf]
    %v49 = vld [vmem:[#allocation2 + $0x34] sm:$0xf]
    %v50 = vld [vmem:[#allocation2 + $0x38] sm:$0xf]
    %v51 = vld [vmem:[#allocation2 + $0x3c] sm:$0xf]
    %v52 = vld [vmem:[%s0] sm:$0xff]
    %v53 = vpack.c.bf16 %v52, %v52
    %v54 = vld [vmem:[%s3] sm:$0xff]
    %v71 = vunpack.c.l.b16 %v36
    %v72 = vunpack.c.l.b16 %v37
    %v73 = vunpack.c.l.b16 %v38
    %v74 = vunpack.c.l.b16 %v39
    %v75 = vunpack.c.l.b16 %v40
    %v76 = vunpack.c.l.b16 %v41
    %v77 = vunpack.c.l.b16 %v42
    %v78 = vunpack.c.l.b16 %v43
    %v79 = vunpack.c.l.b16 %v44
    %v80 = vunpack.c.l.b16 %v45
    %v81 = vunpack.c.l.b16 %v46
    %v82 = vunpack.c.l.b16 %v47
    %v83 = vunpack.c.l.b16 %v48
    %v84 = vunpack.c.l.b16 %v49
    %v85 = vunpack.c.l.b16 %v50
    %v86 = vunpack.c.l.b16 %v51
    %v87 = vpack.c.b16 %v72, %v71
    %v88 = vpack.c.b16 %v74, %v73
    %v89 = vpack.c.b16 %v76, %v75
    %v90 = vpack.c.b16 %v78, %v77
    %v91 = vpack.c.b16 %v80, %v79
    %v92 = vpack.c.b16 %v82, %v81
    %v93 = vpack.c.b16 %v84, %v83
    %v94 = vpack.c.b16 %v86, %v85
    %103 = vmatprep.subr.bf16.mxu0 0
    %104 = vmatpush1.bf16.msra.mxu0 %v94
    %105 = vmatprep.subr.bf16.mxu0 0
    %106 = vmatpush1.bf16.msra.mxu0 %v93
    %107 = vmatprep.subr.bf16.mxu0 0
    %108 = vmatpush1.bf16.msra.mxu0 %v92
    %109 = vmatprep.subr.bf16.mxu0 0
    %110 = vmatpush1.bf16.msra.mxu0 %v91
    %111 = vmatprep.subr.bf16.mxu0 0
    %112 = vmatpush1.bf16.msra.mxu0 %v90
    %113 = vmatprep.subr.bf16.mxu0 0
    %114 = vmatpush1.bf16.msra.mxu0 %v89
    %115 = vmatprep.subr.bf16.mxu0 0
    %116 = vmatpush1.bf16.msra.mxu0 %v88
    %117 = vmatprep.subr.bf16.mxu0 0
    %118 = vmatpush1.bf16.msra.mxu0 %v87
    %119 = vmatprep.subr.bf16.mxu0 0
    %120 = vmatpush2.bf16.msra.mxu0 0
    %121 = vmatprep.subr.bf16.mxu0 0
    %122 = vmatpush2.bf16.msra.mxu0 0
    %123 = vmatprep.subr.bf16.mxu0 0
    %124 = vmatpush2.bf16.msra.mxu0 0
    %125 = vmatprep.subr.bf16.mxu0 0
    %126 = vmatpush2.bf16.msra.mxu0 0
    %127 = vmatprep.subr.bf16.mxu0 0
    %128 = vmatpush2.bf16.msra.mxu0 0
    %129 = vmatprep.subr.bf16.mxu0 0
    %130 = vmatpush2.bf16.msra.mxu0 0
    %131 = vmatprep.subr.bf16.mxu0 0
    %132 = vmatpush2.bf16.msra.mxu0 0
    %133 = vmatprep.subr.bf16.mxu0 0
    %134 = vmatpush2.bf16.msra.mxu0 0
    %135 = vmatprep.mubr.bf16.mxu0 0
    %136 = vmatmul.mubr.bf16.gmra.mxu0 %v53
    %v137 = vpop.f32.mrf.mxu0
    %v138 = vadd.f32 0.0, %v137
    %v139 = vpop.f32.mrf.mxu0
    %v140 = vpop.f32.mrf.mxu0
    %v141 = vpop.f32.mrf.mxu0
    %142 = vdwg.mxu0
    %v143 = vadd.f32 %v54, %v138
    %144 = vst [vmem:[%s3] sm:$0xff] %v143
    // Predicated region
    $region22: #{forward.1} parent=1 // pred_check
      %p145 = pneg %p31
    $region23: #{forward.1} parent=1 // pred_check_branch
      %147 = sbr.rel (%p145) target = $region25
    $region24: #{forward.1} parent=1 // pred_region
      %v148 = vld [vmem:[%s3] sm:$0xff]
      %v149 = vld [vmem:[%s2] sm:$0x1]
      %v151 = vlaneseq
      %v152 = vshrl.u32 %v151, 7
      %v153 = vsub.s32 0, %v152
      %v154 = vrot.slane %v149, %v153
      %v156 = vadd.f32 %v148, %v154
      %157 = vst [vmem:[%s3] sm:$0xff] %v156
      %158 = vmax.xlane.f32.xlu0 %v156
      %v159 = vpop.xlane.xlu0 %158
      %v160 = vsub.f32 %v156, %v159
      %v161 = vmul.f32 %v160, 1.442695
      %v162 = vpow.pop %v161
      %163 = vadd.xlane.f32.xlu0 %v162
      %v164 = vpop.xlane.xlu0 %163
      %v165 = vrcp.pop %v164
      %v166 = vmul.f32 %v162, %v165
      %167 = vst [vmem:[%s4] sm:$0xff] %v166
    $region25: #{forward.1} parent=1 // pred_fallthru
      _
    // Predicated region
    $region26: #{forward.1} parent=1 // pred_check
      _
    $region27: #{forward.1} parent=1 // pred_check_branch
      %169 = sbr.rel (0) target = $region29
    $region28: #{forward.1} parent=1 // pred_region
      _
    $region29: #{forward.1} parent=1 // pred_fallthru
      _
    // Predicated region
    $region30: #{forward.1} parent=1 // pred_check
      _
    $region31: #{forward.1} parent=1 // pred_check_branch
      %171 = sbr.rel (0) target = $region33
    $region32: #{forward.1} parent=1 // pred_region
      _
    $region33: #{forward.1} parent=1 // pred_fallthru
      _
    // Predicated region
    $region34: #{forward.1} parent=1 // pred_check
      _
    $region35: #{forward.1} parent=1 // pred_check_branch
      %173 = sbr.rel (0) target = $region37
    $region36: #{forward.1} parent=1 // pred_region
      _
    $region37: #{forward.1} parent=1 // pred_fallthru
      _
    // Predicated region
    $region38: #{forward.1} parent=1 // pred_check
      _
    $region39: #{forward.1} parent=1 // pred_check_branch
      %175 = sbr.rel (0) target = $region41
    $region40: #{forward.1} parent=1 // pred_region
      _
    $region41: #{forward.1} parent=1 // pred_fallthru
      _
    %176 = vsyncpa [#allocation3], 1

</llo_original>
